<compile_context>
chip_gen: v7x
topology: tpu7x:2x2x1
jax: 0.10.0
libtpu: 0.0.40
codegen_flags: <defaults>
</compile_context>

<pallas_src>
import functools

import jax
import jax.numpy as jnp
from jax.experimental import pallas as pl
from jax.experimental.pallas import tpu as pltpu


def _round_up(x, m):
    return ((x + m - 1) // m) * m


# ---------------------------------------------------------------------------
# Kernel bodies
# ---------------------------------------------------------------------------
def _squeeze_kernel(x_ref, w_ref, b_ref, o_ref, *, H, W):
    # x_ref: (1, H*W, Cin)   w_ref: (Cin, Cout)   b_ref: (1, Cout)
    # o_ref: (1, Lp, Cout)   flat-padded layout with zero halo
    Wp = W + 2
    y = jnp.dot(x_ref[0], w_ref[...], preferred_element_type=jnp.float32)
    y = jnp.maximum(y + b_ref[...], 0.0).astype(o_ref.dtype)
    o_ref[...] = jnp.zeros_like(o_ref)                       # zero halo rows/cols
    for h in range(H):                                       # scatter interior rows
        r0 = (h + 1) * Wp + 1
        o_ref[0, r0:r0 + W, :] = y[h * W:(h + 1) * W, :]


def _conv3x3_kernel(x_ref, w_ref, b_ref, o_ref, acc_ref, *, H, W):
    # 3x3 conv (pad=1, stride=1) + ReLU; flat-padded in, flat-padded out.
    # x_ref: (1, Lp, Cin)  w_ref: (3,3,Cin,Cout)  b_ref: (1,Cout)
    # o_ref: (1, Lp, Cout) acc_ref: (H*(W+2), Cout) f32 scratch
    Wp = W + 2
    L = H * Wp
    acc_ref[...] = jnp.zeros_like(acc_ref)
    for dy in range(3):
        for dx in range(3):
            off = dy * Wp + dx
            acc_ref[...] += jnp.dot(x_ref[0, off:off + L, :], w_ref[dy, dx],
                                    preferred_element_type=jnp.float32)
    y = jnp.maximum(acc_ref[...] + b_ref[...], 0.0)
    # zero the junk columns (padded-layout columns w >= W) so the next layer's
    # halo stays exactly zero
    col = jax.lax.broadcasted_iota(jnp.int32, (L, 1), 0) % Wp
    y = jnp.where(col < W, y, 0.0).astype(o_ref.dtype)
    o_ref[...] = jnp.zeros_like(o_ref)
    o_ref[0, Wp + 1:Wp + 1 + L, :] = y                       # shift into halo frame


def _conv3x3_head_kernel(x_ref, w1_ref, b1_ref, w2_ref, b2_ref, o_ref, acc_ref,
                         *, H, W):
    # Fused pose1 + head: 3x3 conv + ReLU, spatial mean, 1x1 projection, *0.01.
    Wp = W + 2
    L = H * Wp
    acc_ref[...] = jnp.zeros_like(acc_ref)
    for dy in range(3):
        for dx in range(3):
            off = dy * Wp + dx
            acc_ref[...] += jnp.dot(x_ref[0, off:off + L, :], w1_ref[dy, dx],
                                    preferred_element_type=jnp.float32)
    y = jnp.maximum(acc_ref[...] + b1_ref[...], 0.0)
    col = jax.lax.broadcasted_iota(jnp.int32, (L, 1), 0) % Wp
    y = jnp.where(col < W, y, 0.0)                           # mask junk columns
    mean = jnp.sum(y, axis=0, keepdims=True) * (1.0 / (H * W))   # (1, Cmid) f32
    pose = jnp.dot(mean, w2_ref[...], preferred_element_type=jnp.float32)
    pose = 0.01 * (pose + b2_ref[...])
    o_ref[0] = pose.astype(o_ref.dtype)


# ---------------------------------------------------------------------------
# Pallas wrappers
# ---------------------------------------------------------------------------
def squeeze1x1_pallas(x_flat, w, b, *, H, W, out_dtype):
    # x_flat: (N, H*W, Cin)  ->  (N, Lp, Cout) flat-padded, zero halo
    N, HW, Cin = x_flat.shape
    Cout = w.shape[1]
    Lp = _round_up((H + 2) * (W + 2) + 2, 8)
    return pl.pallas_call(
        functools.partial(_squeeze_kernel, H=H, W=W),
        out_shape=jax.ShapeDtypeStruct((N, Lp, Cout), out_dtype),
        grid=(N,),
        in_specs=[
            pl.BlockSpec((1, HW, Cin), lambda n: (n, 0, 0)),
            pl.BlockSpec((Cin, Cout), lambda n: (0, 0)),
            pl.BlockSpec((1, Cout), lambda n: (0, 0)),
        ],
        out_specs=pl.BlockSpec((1, Lp, Cout), lambda n: (n, 0, 0)),
        compiler_params=pltpu.CompilerParams(dimension_semantics=("parallel",)),
    )(x_flat, w, b.reshape(1, Cout))


def conv3x3_pallas(x_flat, w, b, *, H, W, out_dtype):
    # x_flat: (N, Lp, Cin) flat-padded  ->  (N, Lp, Cout) flat-padded
    N, Lp, Cin = x_flat.shape
    Cout = w.shape[-1]
    Lacc = H * (W + 2)
    assert Lp >= (H + 2) * (W + 2) + 2
    return pl.pallas_call(
        functools.partial(_conv3x3_kernel, H=H, W=W),
        out_shape=jax.ShapeDtypeStruct((N, Lp, Cout), out_dtype),
        grid=(N,),
        in_specs=[
            pl.BlockSpec((1, Lp, Cin), lambda n: (n, 0, 0)),
            pl.BlockSpec((3, 3, Cin, Cout), lambda n: (0, 0, 0, 0)),
            pl.BlockSpec((1, Cout), lambda n: (0, 0)),
        ],
        out_specs=pl.BlockSpec((1, Lp, Cout), lambda n: (n, 0, 0)),
        scratch_shapes=[pltpu.VMEM((Lacc, Cout), jnp.float32)],
        compiler_params=pltpu.CompilerParams(dimension_semantics=("parallel",)),
    )(x_flat, w, b.reshape(1, Cout))


def conv3x3_head_pallas(x_flat, w1, b1, w2, b2, *, H, W):
    # Fused pose1 + pose2(1x1) + spatial mean + *0.01  ->  (N, Cf) f32
    N, Lp, Cin = x_flat.shape
    Cmid = w1.shape[-1]
    Cf = w2.shape[-1]
    Lacc = H * (W + 2)
    assert Lp >= (H + 2) * (W + 2) + 2
    out = pl.pallas_call(
        functools.partial(_conv3x3_head_kernel, H=H, W=W),
        out_shape=jax.ShapeDtypeStruct((N, 1, Cf), jnp.float32),
        grid=(N,),
        in_specs=[
            pl.BlockSpec((1, Lp, Cin), lambda n: (n, 0, 0)),
            pl.BlockSpec((3, 3, Cin, Cmid), lambda n: (0, 0, 0, 0)),
            pl.BlockSpec((1, Cmid), lambda n: (0, 0)),
            pl.BlockSpec((Cmid, Cf), lambda n: (0, 0)),
            pl.BlockSpec((1, Cf), lambda n: (0, 0)),
        ],
        out_specs=pl.BlockSpec((1, 1, Cf), lambda n: (n, 0, 0)),
        scratch_shapes=[pltpu.VMEM((Lacc, Cmid), jnp.float32)],
        compiler_params=pltpu.CompilerParams(dimension_semantics=("parallel",)),
    )(x_flat, w1, b1.reshape(1, Cmid), w2, b2.reshape(1, Cf))
    return out.reshape(N, Cf)


# ---------------------------------------------------------------------------
# PoseDecoder module (params initialized deterministically in-script)
# ---------------------------------------------------------------------------
class PoseDecoderPallas:
    def __init__(self, num_ch_enc, num_input_features=1,
                 num_frames_to_predict_for=1, stride=1, out=6, seed=123,
                 compute_dtype=jnp.bfloat16):
        assert stride == 1  # TODO(synk): stride != 1 conv3x3 not implemented
        self.num_ch_enc = num_ch_enc
        self.num_input_features = num_input_features
        self.out_dim = out
        self.compute_dtype = compute_dtype
        if num_frames_to_predict_for is None:
            num_frames_to_predict_for = num_input_features - 1
        self.num_frames_to_predict_for = num_frames_to_predict_for

        cin_sq = int(num_ch_enc[-1])
        cin_p0 = num_input_features * 256
        cf = self.out_dim * num_frames_to_predict_for

        def init(key, shape, fan_in):
            bound = 1.0 / (fan_in ** 0.5)
            return jax.random.uniform(key, shape, jnp.float32, -bound, bound)

        ks = jax.random.split(jax.random.PRNGKey(seed), 8)
        cdt = compute_dtype
        # squeeze: Conv2d(cin_sq, 256, 1)      -> (cin_sq, 256)
        self.w_sq = init(ks[0], (cin_sq, 256), cin_sq).astype(cdt)
        self.b_sq = init(ks[1], (256,), cin_sq)
        # pose0: Conv2d(cin_p0, 256, 3, 1, 1)  -> HWIO (3, 3, cin_p0, 256)
        self.w_p0 = init(ks[2], (3, 3, cin_p0, 256), cin_p0 * 9).astype(cdt)
        self.b_p0 = init(ks[3], (256,), cin_p0 * 9)
        # pose1: Conv2d(256, 256, 3, 1, 1)
        self.w_p1 = init(ks[4], (3, 3, 256, 256), 256 * 9).astype(cdt)
        self.b_p1 = init(ks[5], (256,), 256 * 9)
        # pose2: Conv2d(256, cf, 1)            -> (256, cf)  (kept f32, tiny)
        self.w_p2 = init(ks[6], (256, cf), 256)
        self.b_p2 = init(ks[7], (cf,), 256)

    def __call__(self, input_features):
        # input_features: list (len = num_input_features) of lists of NCHW arrays
        last_features = [f[-1] for f in input_features]
        N, _, H, W = last_features[0].shape
        feats = []
        for x in last_features:
            x = jnp.transpose(x, (0, 2, 3, 1))               # NCHW -> NHWC
            xf = x.reshape(N, H * W, x.shape[-1]).astype(self.compute_dtype)
            feats.append(squeeze1x1_pallas(xf, self.w_sq, self.b_sq, H=H, W=W,
                                           out_dtype=self.compute_dtype))
        # TODO(synk): for num_input_features > 1 the lane-concat could be fused
        # into the squeeze kernels via channel-offset out_specs.
        out = feats[0] if len(feats) == 1 else jnp.concatenate(feats, axis=-1)
        out = conv3x3_pallas(out, self.w_p0, self.b_p0, H=H, W=W,
                             out_dtype=self.compute_dtype)
        pose = conv3x3_head_pallas(out, self.w_p1, self.b_p1,
                                   self.w_p2, self.b_p2, H=H, W=W)   # (N, cf) f32
        return pose.reshape(-1, self.out_dim)


# ---------------------------------------------------------------------------
# Pure-JAX reference (f32 activations, same bf16-rounded weights)
# ---------------------------------------------------------------------------
def _reference_forward(model, last_features_nchw):
    f32 = jnp.float32
    outs = []
    for x in last_features_nchw:
        x = jnp.transpose(x, (0, 2, 3, 1)).astype(f32)
        y = jnp.einsum("nhwc,cd->nhwd", x, model.w_sq.astype(f32)) + model.b_sq
        outs.append(jnp.maximum(y, 0.0))
    out = jnp.concatenate(outs, axis=-1)
    for w, b in ((model.w_p0, model.b_p0), (model.w_p1, model.b_p1)):
        dn = jax.lax.conv_dimension_numbers(out.shape, w.shape,
                                            ("NHWC", "HWIO", "NHWC"))
        out = jax.lax.conv_general_dilated(out, w.astype(f32), (1, 1), "SAME",
                                           dimension_numbers=dn) + b
        out = jnp.maximum(out, 0.0)
    out = jnp.einsum("nhwc,cd->nhwd", out, model.w_p2) + model.b_p2
    pose = 0.01 * out.mean(axis=(1, 2))
    return pose.reshape(-1, model.out_dim)


# ---------------------------------------------------------------------------
if __name__ == "__main__":
    key = jax.random.PRNGKey(0)
    num_ch_enc = [16, 32]                 # only the last entry is used
    N, H, W = 2, 8, 8
    x = jax.random.normal(key, (N, num_ch_enc[-1], H, W), jnp.float32)

    model = PoseDecoderPallas(num_ch_enc, num_input_features=1,
                              num_frames_to_predict_for=1, stride=1, out=6)
    pose = jax.block_until_ready(model([[x]]))   # input_features = [[last_feature]]

    assert pose.shape == (N * model.num_frames_to_predict_for, model.out_dim)
    assert pose.dtype == jnp.float32
    assert bool(jnp.all(jnp.isfinite(pose)))

    ref = jax.block_until_ready(_reference_forward(model, [x]))
    assert jnp.allclose(pose, ref, rtol=1e-1, atol=2e-3), (pose, ref)
    print("KERNEL_OK")
</pallas_src>

<mosaic_0001>
module attributes {stable_mosaic.version = 11 : i64} {
  func.func @_squeeze_kernel(%arg0: i32, %arg1: memref<1x64x32xbf16, #tpu.memory_space<vmem>>, %arg2: memref<32x256xbf16, #tpu.memory_space<vmem>>, %arg3: memref<1x256xf32, #tpu.memory_space<vmem>>, %arg4: memref<1x104x256xbf16, #tpu.memory_space<vmem>>) attributes {dimension_semantics = [#tpu.dimension_semantics<parallel>], iteration_bounds = array<i64: 2>, scalar_prefetch = 0 : i64, scratch_operands = 0 : i64, tpu.core_type = #tpu.core_type<tc>, window_params = [{transform_indices = @transform_0, window_bounds = array<i64: 1, 64, 32>}, {pipeline_mode = #tpu.pipeline_mode<synchronous>, transform_indices = @transform_1, window_bounds = array<i64: 32, 256>}, {pipeline_mode = #tpu.pipeline_mode<synchronous>, transform_indices = @transform_2, window_bounds = array<i64: 1, 256>}, {transform_indices = @transform_3, window_bounds = array<i64: 1, 104, 256>}]} {
    %c0 = arith.constant 0 : index
    %c0_0 = arith.constant 0 : index
    %c0_1 = arith.constant 0 : index
    %0 = vector.load %arg1[%c0, %c0_0, %c0_1] : memref<1x64x32xbf16, #tpu.memory_space<vmem>>, vector<1x64x32xbf16>
    %1 = vector.shape_cast %0 : vector<1x64x32xbf16> to vector<64x32xbf16>
    %c0_2 = arith.constant 0 : index
    %c0_3 = arith.constant 0 : index
    %2 = vector.load %arg2[%c0_2, %c0_3] : memref<32x256xbf16, #tpu.memory_space<vmem>>, vector<32x256xbf16>
    %cst = arith.constant dense<0.000000e+00> : vector<64x256xf32>
    %3 = tpu.matmul %1, %2, %cst {dimension_numbers = #tpu.dot_dimension_numbers<[1], [0], [0], [1], [0, 0, 1, 1], [], []>} : vector<64x32xbf16>, vector<32x256xbf16>, vector<64x256xf32> -> vector<64x256xf32>
    %c0_4 = arith.constant 0 : index
    %c0_5 = arith.constant 0 : index
    %4 = vector.load %arg3[%c0_4, %c0_5] : memref<1x256xf32, #tpu.memory_space<vmem>>, vector<1x256xf32>
    %5 = vector.broadcast %4 : vector<1x256xf32> to vector<64x256xf32>
    %6 = arith.addf %3, %5 : vector<64x256xf32>
    %cst_6 = arith.constant 0.000000e+00 : f32
    %7 = vector.broadcast %cst_6 : f32 to vector<64x256xf32>
    %8 = arith.maximumf %6, %7 : vector<64x256xf32>
    %9 = arith.truncf %8 : vector<64x256xf32> to vector<64x256xbf16>
    %cst_7 = arith.constant 0.000000e+00 : bf16
    %10 = vector.broadcast %cst_7 : bf16 to vector<1x104x256xbf16>
    %c0_8 = arith.constant 0 : index
    %c0_9 = arith.constant 0 : index
    %c0_10 = arith.constant 0 : index
    %11 = vector.load %arg4[%c0_8, %c0_9, %c0_10] : memref<1x104x256xbf16, #tpu.memory_space<vmem>>, vector<1x104x256xbf16>
    tpu.vector_store %arg4[%c0_8, %c0_9, %c0_10], %10 {strides = array<i32>} : memref<1x104x256xbf16, #tpu.memory_space<vmem>>, vector<1x104x256xbf16>,
    %12 = vector.extract_strided_slice %9 {offsets = [0, 0], sizes = [8, 256], strides = [1, 1]} : vector<64x256xbf16> to vector<8x256xbf16>
    %c0_11 = arith.constant 0 : index
    %c11 = arith.constant 11 : index
    %c0_12 = arith.constant 0 : index
    %13 = vector.load %arg4[%c0_11, %c11, %c0_12] : memref<1x104x256xbf16, #tpu.memory_space<vmem>>, vector<1x8x256xbf16>
    %14 = vector.shape_cast %13 : vector<1x8x256xbf16> to vector<8x256xbf16>
    %15 = vector.shape_cast %12 : vector<8x256xbf16> to vector<1x8x256xbf16>
    tpu.vector_store %arg4[%c0_11, %c11, %c0_12], %15 {strides = array<i32>} : memref<1x104x256xbf16, #tpu.memory_space<vmem>>, vector<1x8x256xbf16>,
    %16 = vector.extract_strided_slice %9 {offsets = [8, 0], sizes = [8, 256], strides = [1, 1]} : vector<64x256xbf16> to vector<8x256xbf16>
    %c0_13 = arith.constant 0 : index
    %c21 = arith.constant 21 : index
    %c0_14 = arith.constant 0 : index
    %17 = vector.load %arg4[%c0_13, %c21, %c0_14] : memref<1x104x256xbf16, #tpu.memory_space<vmem>>, vector<1x8x256xbf16>
    %18 = vector.shape_cast %17 : vector<1x8x256xbf16> to vector<8x256xbf16>
    %19 = vector.shape_cast %16 : vector<8x256xbf16> to vector<1x8x256xbf16>
    tpu.vector_store %arg4[%c0_13, %c21, %c0_14], %19 {strides = array<i32>} : memref<1x104x256xbf16, #tpu.memory_space<vmem>>, vector<1x8x256xbf16>,
    %20 = vector.extract_strided_slice %9 {offsets = [16, 0], sizes = [8, 256], strides = [1, 1]} : vector<64x256xbf16> to vector<8x256xbf16>
    %c0_15 = arith.constant 0 : index
    %c31 = arith.constant 31 : index
    %c0_16 = arith.constant 0 : index
    %21 = vector.load %arg4[%c0_15, %c31, %c0_16] : memref<1x104x256xbf16, #tpu.memory_space<vmem>>, vector<1x8x256xbf16>
    %22 = vector.shape_cast %21 : vector<1x8x256xbf16> to vector<8x256xbf16>
    %23 = vector.shape_cast %20 : vector<8x256xbf16> to vector<1x8x256xbf16>
    tpu.vector_store %arg4[%c0_15, %c31, %c0_16], %23 {strides = array<i32>} : memref<1x104x256xbf16, #tpu.memory_space<vmem>>, vector<1x8x256xbf16>,
    %24 = vector.extract_strided_slice %9 {offsets = [24, 0], sizes = [8, 256], strides = [1, 1]} : vector<64x256xbf16> to vector<8x256xbf16>
    %c0_17 = arith.constant 0 : index
    %c41 = arith.constant 41 : index
    %c0_18 = arith.constant 0 : index
    %25 = vector.load %arg4[%c0_17, %c41, %c0_18] : memref<1x104x256xbf16, #tpu.memory_space<vmem>>, vector<1x8x256xbf16>
    %26 = vector.shape_cast %25 : vector<1x8x256xbf16> to vector<8x256xbf16>
    %27 = vector.shape_cast %24 : vector<8x256xbf16> to vector<1x8x256xbf16>
    tpu.vector_store %arg4[%c0_17, %c41, %c0_18], %27 {strides = array<i32>} : memref<1x104x256xbf16, #tpu.memory_space<vmem>>, vector<1x8x256xbf16>,
    %28 = vector.extract_strided_slice %9 {offsets = [32, 0], sizes = [8, 256], strides = [1, 1]} : vector<64x256xbf16> to vector<8x256xbf16>
    %c0_19 = arith.constant 0 : index
    %c51 = arith.constant 51 : index
    %c0_20 = arith.constant 0 : index
    %29 = vector.load %arg4[%c0_19, %c51, %c0_20] : memref<1x104x256xbf16, #tpu.memory_space<vmem>>, vector<1x8x256xbf16>
    %30 = vector.shape_cast %29 : vector<1x8x256xbf16> to vector<8x256xbf16>
    %31 = vector.shape_cast %28 : vector<8x256xbf16> to vector<1x8x256xbf16>
    tpu.vector_store %arg4[%c0_19, %c51, %c0_20], %31 {strides = array<i32>} : memref<1x104x256xbf16, #tpu.memory_space<vmem>>, vector<1x8x256xbf16>,
    %32 = vector.extract_strided_slice %9 {offsets = [40, 0], sizes = [8, 256], strides = [1, 1]} : vector<64x256xbf16> to vector<8x256xbf16>
    %c0_21 = arith.constant 0 : index
    %c61 = arith.constant 61 : index
    %c0_22 = arith.constant 0 : index
    %33 = vector.load %arg4[%c0_21, %c61, %c0_22] : memref<1x104x256xbf16, #tpu.memory_space<vmem>>, vector<1x8x256xbf16>
    %34 = vector.shape_cast %33 : vector<1x8x256xbf16> to vector<8x256xbf16>
    %35 = vector.shape_cast %32 : vector<8x256xbf16> to vector<1x8x256xbf16>
    tpu.vector_store %arg4[%c0_21, %c61, %c0_22], %35 {strides = array<i32>} : memref<1x104x256xbf16, #tpu.memory_space<vmem>>, vector<1x8x256xbf16>,
    %36 = vector.extract_strided_slice %9 {offsets = [48, 0], sizes = [8, 256], strides = [1, 1]} : vector<64x256xbf16> to vector<8x256xbf16>
    %c0_23 = arith.constant 0 : index
    %c71 = arith.constant 71 : index
    %c0_24 = arith.constant 0 : index
    %37 = vector.load %arg4[%c0_23, %c71, %c0_24] : memref<1x104x256xbf16, #tpu.memory_space<vmem>>, vector<1x8x256xbf16>
    %38 = vector.shape_cast %37 : vector<1x8x256xbf16> to vector<8x256xbf16>
    %39 = vector.shape_cast %36 : vector<8x256xbf16> to vector<1x8x256xbf16>
    tpu.vector_store %arg4[%c0_23, %c71, %c0_24], %39 {strides = array<i32>} : memref<1x104x256xbf16, #tpu.memory_space<vmem>>, vector<1x8x256xbf16>,
    %40 = vector.extract_strided_slice %9 {offsets = [56, 0], sizes = [8, 256], strides = [1, 1]} : vector<64x256xbf16> to vector<8x256xbf16>
    %c0_25 = arith.constant 0 : index
    %c81 = arith.constant 81 : index
    %c0_26 = arith.constant 0 : index
    %41 = vector.load %arg4[%c0_25, %c81, %c0_26] : memref<1x104x256xbf16, #tpu.memory_space<vmem>>, vector<1x8x256xbf16>
    %42 = vector.shape_cast %41 : vector<1x8x256xbf16> to vector<8x256xbf16>
    %43 = vector.shape_cast %40 : vector<8x256xbf16> to vector<1x8x256xbf16>
    tpu.vector_store %arg4[%c0_25, %c81, %c0_26], %43 {strides = array<i32>} : memref<1x104x256xbf16, #tpu.memory_space<vmem>>, vector<1x8x256xbf16>,
    return
  }
  func.func @transform_0(%arg0: i32) -> (i32, i32, i32) {
    %c0_i32 = arith.constant 0 : i32
    %c0_i32_0 = arith.constant 0 : i32
    %c0_i32_1 = arith.constant 0 : i32
    return %arg0, %c0_i32, %c0_i32_0 : i32, i32, i32
  }
  func.func @transform_1(%arg0: i32) -> (i32, i32) {
    %c0_i32 = arith.constant 0 : i32
    %c0_i32_0 = arith.constant 0 : i32
    %c0_i32_1 = arith.constant 0 : i32
    return %c0_i32, %c0_i32_0 : i32, i32
  }
  func.func @transform_2(%arg0: i32) -> (i32, i32) {
    %c0_i32 = arith.constant 0 : i32
    %c0_i32_0 = arith.constant 0 : i32
    %c0_i32_1 = arith.constant 0 : i32
    return %c0_i32, %c0_i32_0 : i32, i32
  }
  func.func @transform_3(%arg0: i32) -> (i32, i32, i32) {
    %c0_i32 = arith.constant 0 : i32
    %c0_i32_0 = arith.constant 0 : i32
    %c0_i32_1 = arith.constant 0 : i32
    return %arg0, %c0_i32, %c0_i32_0 : i32, i32, i32
  }
}

</mosaic_0001>

<llo_original>
// kernel: tpu_custom_call.1
$region0: #{tpu_custom_call.1}
  #allocation0 [shape = 'u32[]', space=smem, size = 0x4, offset = 0x4, fixed_abs, tag = 'smem constant byte address 0x4 - core index']
  #allocation1 [shape = 'u32[144,128]{1,0:T(1,128)}', space=vmem, size = 0x12000, scoped, tag = 'internal scratch']
  %s0 = inlined_call_operand.vmem [shape: bf16[2,64,32], index: 0, kind: input, shape index: {}]
  %s1 = inlined_call_operand.vmem [shape: bf16[32,256], index: 1, kind: input, shape index: {}]
  %s2 = inlined_call_operand.vmem [shape: f32[1,256], index: 2, kind: input, shape index: {}]
  %s3 = inlined_call_operand.hbm [shape: bf16[2,104,256], index: 3, kind: output, shape index: {}]
  %s4 = sld [smem:[#allocation0]]
  $region45: #{tpu_custom_call.1} parent=0
    _
  %s6 = ssub.s32 1, %s4
  %s7 = scalar_select 0, %s6, %s4
  $region1: #{tpu_custom_call.1} parent=0
    #allocation2 [shape = 'u8[106496]{0}', space=vmem, size = 0x1a000, scoped, tag = 'output window, operand 0']
    #allocation3 [shape = 's32[2]{0}', space=sflag, size = 0x8, scoped, tag = 'scoped memory for tpu_custom_call.1']
    %8 = vsyncpa [#allocation3], 0
    %s9 = scalar_lea.sflag [#allocation3], 1
    %10 = vsyncpa %s9, 0
    loop: start=0, step=1, limit=4
    $region2: #{tpu_custom_call.1} parent=1 // loop_pre_header
      _
    $region3: #{tpu_custom_call.1} parent=1 // loop_header
      %s12 = sphi 0, %s16
      %p13 = scmp.ge.s32.totalorder %s12, 4
      %s22 = sphi 0, %s24
      %s25 = sphi 0, %s22
      %s26 = sphi 0, %s25
      %s42 = sphi 0, %s26
      %s46 = sphi 0, %s46
      %s48 = sphi 0, %s46
      %s49 = sphi 0, %s48
      %s63 = sphi 0, %s49
      %s67 = sphi 0, %s67
      %s69 = sphi 0, %s67
      %s70 = sphi 0, %s69
      %s84 = sphi 0, %s70
      %s90 = sphi 0, %s92
      %s93 = sphi 0, %s90
      %s94 = sphi 0, %s93
      %s110 = sphi 0, %s94
    $region4: #{tpu_custom_call.1} parent=1 // loop_header_branch
      %15 = sbr.rel (%p13) target = $region8
    $region5: #{tpu_custom_call.1} parent=1 // loop_body
      %s17 = ssub.s32 %s12, 1
      %s18 = ssub.s32 %s12, 2
      %s19 = sadd.s32 %s12, 1
      %s20 = ssub.s32 %s12, %s19
      %p21 = scmp.eq.s32.totalorder %s20, 0
      %s23 = sadd.s32 %s22, 1
      %s24 = scalar_select %p21, %s22, %s23
      %p27 = pneg %p21
      %p28 = scmp.eq.s32.totalorder %s12, 1
      %p29 = por %p27, %p28
      %p30 = scmp.ne.s32.totalorder %s22, %s25
      %p31 = scmp.eq.s32.totalorder %s12, 0
      %p32 = por %p30, %p31
      %p33 = scmp.ne.s32.totalorder %s22, %s25
      %p34 = scmp.eq.s32.totalorder %s17, 1
      %p35 = por %p33, %p34
      %p36 = scmp.ne.s32.totalorder %s25, %s26
      %p37 = scmp.eq.s32.totalorder %s17, 0
      %p38 = por %p36, %p37
      %p39 = scmp.ne.s32.totalorder %s25, %s26
      %p40 = scmp.eq.s32.totalorder %s18, 1
      %p41 = por %p39, %p40
      %p43 = scmp.ne.s32.totalorder %s26, %s42
      %p44 = scmp.eq.s32.totalorder %s18, 0
      %p45 = por %p43, %p44
      %s47 = sadd.s32 %s46, 1
      %p50 = scmp.eq.s32.totalorder %s12, 1
      %p51 = scmp.ne.s32.totalorder %s46, %s48
      %p52 = scmp.eq.s32.totalorder %s12, 0
      %p53 = por %p51, %p52
      %p54 = scmp.ne.s32.totalorder %s46, %s48
      %p55 = scmp.eq.s32.totalorder %s17, 1
      %p56 = por %p54, %p55
      %p57 = scmp.ne.s32.totalorder %s48, %s49
      %p58 = scmp.eq.s32.totalorder %s17, 0
      %p59 = por %p57, %p58
      %p60 = scmp.ne.s32.totalorder %s48, %s49
      %p61 = scmp.eq.s32.totalorder %s18, 1
      %p62 = por %p60, %p61
      %p64 = scmp.ne.s32.totalorder %s49, %s63
      %p65 = scmp.eq.s32.totalorder %s18, 0
      %p66 = por %p64, %p65
      %s68 = sadd.s32 %s67, 1
      %p71 = scmp.eq.s32.totalorder %s12, 1
      %p72 = scmp.ne.s32.totalorder %s67, %s69
      %p73 = scmp.eq.s32.totalorder %s12, 0
      %p74 = por %p72, %p73
      %p75 = scmp.ne.s32.totalorder %s67, %s69
      %p76 = scmp.eq.s32.totalorder %s17, 1
      %p77 = por %p75, %p76
      %p78 = scmp.ne.s32.totalorder %s69, %s70
      %p79 = scmp.eq.s32.totalorder %s17, 0
      %p80 = por %p78, %p79
      %p81 = scmp.ne.s32.totalorder %s69, %s70
      %p82 = scmp.eq.s32.totalorder %s18, 1
      %p83 = por %p81, %p82
      %p85 = scmp.ne.s32.totalorder %s70, %s84
      %p86 = scmp.eq.s32.totalorder %s18, 0
      %p87 = por %p85, %p86
      %s88 = ssub.s32 %s12, %s19
      %p89 = scmp.eq.s32.totalorder %s88, 0
      %s91 = sadd.s32 %s90, 1
      %s92 = scalar_select %p89, %s90, %s91
      %p95 = pneg %p89
      %p96 = scmp.eq.s32.totalorder %s12, 1
      %p97 = por %p95, %p96
      %p98 = scmp.ne.s32.totalorder %s90, %s93
      %p99 = scmp.eq.s32.totalorder %s12, 0
      %p100 = por %p98, %p99
      %p101 = scmp.ne.s32.totalorder %s90, %s93
      %p102 = scmp.eq.s32.totalorder %s17, 1
      %p103 = por %p101, %p102
      %p104 = scmp.ne.s32.totalorder %s93, %s94
      %p105 = scmp.eq.s32.totalorder %s17, 0
      %p106 = por %p104, %p105
      %p107 = scmp.ne.s32.totalorder %s93, %s94
      %p108 = scmp.eq.s32.totalorder %s18, 1
      %p109 = por %p107, %p108
      %p111 = scmp.ne.s32.totalorder %s94, %s110
      %p112 = scmp.eq.s32.totalorder %s18, 0
      %p113 = por %p111, %p112
      %p114 = scmp.le.s32.totalorder 1, %s12
      %p115 = scmp.lt.s32.totalorder %s12, 3
      %p116 = pnand %p114, %p115
      %p117 = pneg %p116
      // Predicated region
      $region9: #{tpu_custom_call.1} parent=5 // pred_check
        _
      $region10: #{tpu_custom_call.1} parent=5 // pred_check_branch
        %119 = sbr.rel (%p116) target = $region12
      $region11: #{tpu_custom_call.1} parent=5 // pred_region
        %s120 = ssub.s32 %s12, 1
        // Predicated region
        $region13: #{tpu_custom_call.1} parent=11 // pred_check
          %p121 = pneg %p59
        $region14: #{tpu_custom_call.1} parent=11 // pred_check_branch
          %123 = sbr.rel (%p121) target = $region16
        $region15: #{tpu_custom_call.1} parent=11 // pred_region
          _
        $region16: #{tpu_custom_call.1} parent=11 // pred_fallthru
          _
        // Predicated region
        $region17: #{tpu_custom_call.1} parent=11 // pred_check
          %p124 = pneg %p80
        $region18: #{tpu_custom_call.1} parent=11 // pred_check_branch
          %126 = sbr.rel (%p124) target = $region20
        $region19: #{tpu_custom_call.1} parent=11 // pred_region
          _
        $region20: #{tpu_custom_call.1} parent=11 // pred_fallthru
          _
      $region12: #{tpu_custom_call.1} parent=5 // pred_fallthru
        _
      %p127 = scmp.lt.s32.totalorder %s12, 2
      // Predicated region
      $region21: #{tpu_custom_call.1} parent=5 // pred_check
        %p128 = pneg %p127
      $region22: #{tpu_custom_call.1} parent=5 // pred_check_branch
        %130 = sbr.rel (%p128) target = $region24
      $region23: #{tpu_custom_call.1} parent=5 // pred_region
        // Predicated region
        $region25: #{tpu_custom_call.1} parent=23 // pred_check
          %p131 = pneg %p32
        $region26: #{tpu_custom_call.1} parent=23 // pred_check_branch
          %133 = sbr.rel (%p131) target = $region28
        $region27: #{tpu_custom_call.1} parent=23 // pred_region
          %p134 = scmp.lt.s32.totalorder %s12, 1
          %s135 = scalar_select %p134, %s12, 1
          %s136 = smul.addr %s135, 8
          %s137 = smul.addr %s136, 4
          %s138 = scalar_lea.vmem %s0, %s137
        $region28: #{tpu_custom_call.1} parent=23 // pred_fallthru
          _
      $region24: #{tpu_custom_call.1} parent=5 // pred_fallthru
        _
      %p139 = scmp.le.s32.totalorder 1, %s12
      %p140 = scmp.lt.s32.totalorder %s12, 3
      %p141 = pnand %p139, %p140
      %p142 = pneg %p141
      // Predicated region
      $region29: #{tpu_custom_call.1} parent=5 // pred_check
        _
      $region30: #{tpu_custom_call.1} parent=5 // pred_check_branch
        %144 = sbr.rel (%p141) target = $region32
      $region31: #{tpu_custom_call.1} parent=5 // pred_region
        %s145 = ssub.s32 %s12, 1
        %p146 = scmp.lt.s32.totalorder %s17, 1
        %s147 = scalar_select %p146, %s17, 1
        %s148 = smul.addr %s147, 8
        %s149 = smul.addr %s148, 4
        %s150 = scalar_lea.vmem %s0, %s149
        %p151 = pneg %p38
        %p152 = pneg %p35
        %p153 = pneg %p59
        %p154 = pneg %p56
        %p155 = pneg %p80
        %p156 = pneg %p77
        %p157 = pneg %p106
        %p158 = pneg %p103
        %s159 = sand.u32 %s93, 1
        %s160 = scalar_lea.sflag [#allocation3], %s159
        %s161 = sand.u32 %s93, 1
        %s162 = smul.addr %s161, 104
        %s163 = scalar_lea.vmem [#allocation2], %s162
        %p164 = scmp.lt.s32.totalorder %s17, 1
        %s165 = scalar_select %p164, %s17, 1
        %s166 = smul.addr %s165, 8
        %s167 = smul.addr %s166, 4
        %s168 = scalar_lea.vmem %s0, %s167
        %v170 = vld [vmem:[%s168] sm:$0xf]
        %v171 = vld [vmem:[%s168 + $0x4] sm:$0xf]
        %v172 = vld [vmem:[%s168 + $0x8] sm:$0xf]
        %v173 = vld [vmem:[%s168 + $0xc] sm:$0xf]
        %v174 = vld [vmem:[%s168 + $0x10] sm:$0xf]
        %v175 = vld [vmem:[%s168 + $0x14] sm:$0xf]
        %v176 = vld [vmem:[%s168 + $0x18] sm:$0xf]
        %v177 = vld [vmem:[%s168 + $0x1c] sm:$0xf]
        %v178 = vld [vmem:[%s1] sm:$0xff]
        %v179 = vld [vmem:[%s1 + $0x8] sm:$0xff]
        %v180 = vld [vmem:[%s1 + $0x10] sm:$0xff]
        %v181 = vld [vmem:[%s1 + $0x18] sm:$0xff]
        %v182 = vld [vmem:[%s2] sm:$0x3]
        %v184 = vlaneseq
        %v185 = vshrl.u32 %v184, 7
        %v186 = vsub.s32 0, %v185
        %v187 = vrot.slane %v182, %v186
        %v188 = vlaneseq
        %v189 = vshrl.u32 %v188, 7
        %v190 = vsub.s32 1, %v189
        %v191 = vrot.slane %v182, %v190
        %v202 = vunpack.c.l.b16 %v170
        %v203 = vunpack.c.l.b16 %v171
        %v204 = vunpack.c.l.b16 %v172
        %v205 = vunpack.c.l.b16 %v173
        %v206 = vunpack.c.l.b16 %v174
        %v207 = vunpack.c.l.b16 %v175
        %v208 = vunpack.c.l.b16 %v176
        %v209 = vunpack.c.l.b16 %v177
        %v210 = vpack.c.b16 %v203, %v202
        %v211 = vpack.c.b16 %v205, %v204
        %v212 = vpack.c.b16 %v207, %v206
        %v213 = vpack.c.b16 %v209, %v208
        %v218 = vunpack.c.l.b16 %v178
        %v219 = vunpack.c.h.b16 %v178
        %v220 = vunpack.c.l.b16 %v179
        %v221 = vunpack.c.h.b16 %v179
        %v222 = vunpack.c.l.b16 %v180
        %v223 = vunpack.c.h.b16 %v180
        %v224 = vunpack.c.l.b16 %v181
        %v225 = vunpack.c.h.b16 %v181
        %v226 = vpack.c.b16 %v220, %v218
        %v227 = vpack.c.b16 %v221, %v219
        %v228 = vpack.c.b16 %v224, %v222
        %v229 = vpack.c.b16 %v225, %v223
        %vm234 = vcmask 261120
        %v236 = vsel %vm234, %v210, 0
        %v239 = vsel %vm234, %v211, 0
        %v242 = vsel %vm234, %v212, 0
        %v245 = vsel %vm234, %v213, 0
        %247 = vmatprep.subr.bf16.mxu0 %v227
        %248 = vmatpush1.bf16.msra.mxu0 %v226
        %249 = vmatprep.subr.bf16.mxu0 %v229
        %250 = vmatpush1.bf16.msra.mxu0 %v228
        %251 = vmatprep.subr.bf16.mxu0 0
        %252 = vmatpush1.bf16.msra.mxu0 0
        %253 = vmatprep.subr.bf16.mxu0 0
        %254 = vmatpush1.bf16.msra.mxu0 0
        %255 = vmatprep.subr.bf16.mxu0 0
        %256 = vmatpush1.bf16.msra.mxu0 0
        %257 = vmatprep.subr.bf16.mxu0 0
        %258 = vmatpush1.bf16.msra.mxu0 0
        %259 = vmatprep.subr.bf16.mxu0 0
        %260 = vmatpush1.bf16.msra.mxu0 0
        %261 = vmatprep.subr.bf16.mxu0 0
        %262 = vmatpush1.bf16.msra.mxu0 0
        %263 = vmatprep.subr.bf16.mxu0 0
        %264 = vmatpush1.bf16.msra.mxu0 0
        %265 = vmatprep.subr.bf16.mxu0 0
        %266 = vmatpush1.bf16.msra.mxu0 0
        %267 = vmatprep.subr.bf16.mxu0 0
        %268 = vmatpush1.bf16.msra.mxu0 0
        %269 = vmatprep.subr.bf16.mxu0 0
        %270 = vmatpush1.bf16.msra.mxu0 0
        %271 = vmatprep.subr.bf16.mxu0 0
        %272 = vmatpush1.bf16.msra.mxu0 0
        %273 = vmatprep.subr.bf16.mxu0 0
        %274 = vmatpush1.bf16.msra.mxu0 0
        %275 = vmatprep.subr.bf16.mxu0 0
        %276 = vmatpush1.bf16.msra.mxu0 0
        %277 = vmatprep.subr.bf16.mxu0 0
        %278 = vmatpush1.bf16.msra.mxu0 0
        %279 = vmatprep.mubr.bf16.mxu0 0
        %280 = vmatmul.mubr.bf16.gmra.mrb[0].mxu0 %v236
        %v281 = vpop.f32.mrb[0].mxu0
        %v282 = vadd.f32 %v187, %v281
        %v283 = vpop.f32.mrb[0].mxu0
        %v284 = vadd.f32 %v191, %v283
        %v285 = vpop.f32.mrb[0].mxu0
        %v286 = vadd.f32 %v187, %v285
        %v287 = vpop.f32.mrb[0].mxu0
        %v288 = vadd.f32 %v191, %v287
        %289 = vmatprep.mubr.bf16.mxu0 0
        %290 = vmatmul.mubr.bf16.gmra.mrb[0].mxu0 %v239
        %v291 = vpop.f32.mrb[0].mxu0
        %v292 = vadd.f32 %v187, %v291
        %v293 = vpop.f32.mrb[0].mxu0
        %v294 = vadd.f32 %v191, %v293
        %v295 = vpop.f32.mrb[0].mxu0
        %v296 = vadd.f32 %v187, %v295
        %v297 = vpop.f32.mrb[0].mxu0
        %v298 = vadd.f32 %v191, %v297
        %299 = vmatprep.mubr.bf16.mxu0 0
        %300 = vmatmul.mubr.bf16.gmra.mrb[0].mxu0 %v242
        %v301 = vpop.f32.mrb[0].mxu0
        %v302 = vadd.f32 %v187, %v301
        %v303 = vpop.f32.mrb[0].mxu0
        %v304 = vadd.f32 %v191, %v303
        %v305 = vpop.f32.mrb[0].mxu0
        %v306 = vadd.f32 %v187, %v305
        %v307 = vpop.f32.mrb[0].mxu0
        %v308 = vadd.f32 %v191, %v307
        %309 = vmatprep.mubr.bf16.mxu0 0
        %310 = vmatmul.mubr.bf16.gmra.mrb[0].mxu0 %v245
        %v311 = vpop.f32.mrb[0].mxu0
        %v312 = vadd.f32 %v187, %v311
        %v313 = vpop.f32.mrb[0].mxu0
        %v314 = vadd.f32 %v191, %v313
        %v315 = vpop.f32.mrb[0].mxu0
        %v316 = vadd.f32 %v187, %v315
        %v317 = vpop.f32.mrb[0].mxu0
        %v318 = vadd.f32 %v191, %v317
        %319 = vdwg.mxu0
        %v320 = vmax.f32 %v282, 0.0
        %v321 = vmax.f32 %v284, 0.0
        %v322 = vmax.f32 %v286, 0.0
        %v323 = vmax.f32 %v288, 0.0
        %v324 = vmax.f32 %v292, 0.0
        %v325 = vmax.f32 %v294, 0.0
        %v326 = vmax.f32 %v296, 0.0
        %v327 = vmax.f32 %v298, 0.0
        %v328 = vmax.f32 %v302, 0.0
        %v329 = vmax.f32 %v304, 0.0
        %v330 = vmax.f32 %v306, 0.0
        %v331 = vmax.f32 %v308, 0.0
        %v332 = vmax.f32 %v312, 0.0
        %v333 = vmax.f32 %v314, 0.0
        %v334 = vmax.f32 %v316, 0.0
        %v335 = vmax.f32 %v318, 0.0
        %v336 = vpack.c.bf16 %v322, %v320
        %v337 = vpack.c.bf16 %v323, %v321
        %v338 = vpack.c.bf16 %v326, %v324
        %v339 = vpack.c.bf16 %v327, %v325
        %v340 = vpack.c.bf16 %v330, %v328
        %v341 = vpack.c.bf16 %v331, %v329
        %v342 = vpack.c.bf16 %v334, %v332
        %v343 = vpack.c.bf16 %v335, %v333
        %344 = vst [vmem:[%s163] sm:$0xff] 0
        %345 = vst [vmem:[%s163 + $0x8] sm:$0xff] 0
        %346 = vst [vmem:[%s163 + $0x10] sm:$0xff] 0
        %347 = vst [vmem:[%s163 + $0x18] sm:$0xff] 0
        %348 = vst [vmem:[%s163 + $0x20] sm:$0xff] 0
        %349 = vst [vmem:[%s163 + $0x28] sm:$0xff] 0
        %350 = vst [vmem:[%s163 + $0x30] sm:$0xff] 0
        %351 = vst [vmem:[%s163 + $0x38] sm:$0xff] 0
        %352 = vst [vmem:[%s163 + $0x40] sm:$0xff] 0
        %353 = vst [vmem:[%s163 + $0x48] sm:$0xff] 0
        %354 = vst [vmem:[%s163 + $0x50] sm:$0xff] 0
        %355 = vst [vmem:[%s163 + $0x58] sm:$0xff] 0
        %356 = vst [vmem:[%s163 + $0x60] sm:$0xff] 0
        %v359 = vunpack.c.l.b16 %v336
        %v360 = vunpack.c.l.b16 %v337
        %v361 = vpack.c.b16 %v360, %v359
        %v363 = vshrl.u32 %v361, 16
        %v365 = vrot.slane %v363, 6
        %v366 = vshll.u32 %v361, 16
        %v368 = vrot.slane %v366, 7
        %v369 = vor.u32 %v365, %v368
        %v370 = vrot.slane %v369, 4
        %vm373 = vcmask 1043457
        %vm374 = vsmask.f32 7942
        %vm375 = vmand %vm373, %vm374
        %vm376 = vcmask 1047557
        %vm377 = vsmask.f32 7958
        %vm378 = vmand %vm376, %vm377
        %vm379 = vmor %vm378, %vm375
        %v380 = vld [vmem:[%s163 + $0x8] sm:$0xee]
        %v381 = vsel %vm379, %v369, %v380
        %382 = vst [vmem:[%s163 + $0x8] sm:$0xee] %v381
        %vm383 = vcmask 1041408
        %vm384 = vsmask.f32 1280
        %vm385 = vmand %vm383, %vm384
        %vm386 = vcmask 1045508
        %vm387 = vsmask.f32 5376
        %vm388 = vmand %vm386, %vm387
        %vm389 = vmor %vm388, %vm385
        %v390 = vld [vmem:[%s163 + $0x10] sm:$0x33]
        %v391 = vsel %vm389, %v370, %v390
        %392 = vst [vmem:[%s163 + $0x10] sm:$0x33] %v391
        %v393 = vunpack.c.h.b16 %v336
        %v394 = vunpack.c.h.b16 %v337
        %v395 = vpack.c.b16 %v394, %v393
        %v397 = vshrl.u32 %v395, 16
        %v399 = vrot.slane %v397, 5
        %v400 = vshll.u32 %v395, 16
        %v402 = vrot.slane %v400, 6
        %v403 = vor.u32 %v399, %v402
        %v404 = vrot.slane %v403, 4
        %vm407 = vcmask 1043458
        %vm408 = vsmask.f32 7946
        %vm409 = vmand %vm407, %vm408
        %vm410 = vcmask 1047558
        %vm411 = vsmask.f32 7962
        %vm412 = vmand %vm410, %vm411
        %vm413 = vmor %vm412, %vm409
        %v414 = vld [vmem:[%s163 + $0x10] sm:$0xcc]
        %v415 = vsel %vm413, %v403, %v414
        %416 = vst [vmem:[%s163 + $0x10] sm:$0xcc] %v415
        %vm417 = vcmask 1042432
        %vm418 = vsmask.f32 2304
        %vm419 = vmand %vm417, %vm418
        %vm420 = vcmask 1046532
        %vm421 = vsmask.f32 6400
        %vm422 = vmand %vm420, %vm421
        %vm423 = vmor %vm422, %vm419
        %v424 = vld [vmem:[%s163 + $0x18] sm:$0x77]
        %v425 = vsel %vm423, %v404, %v424
        %426 = vst [vmem:[%s163 + $0x18] sm:$0x77] %v425
        %v429 = vunpack.c.l.b16 %v338
        %v430 = vunpack.c.l.b16 %v339
        %v431 = vpack.c.b16 %v430, %v429
        %v433 = vshll.u32 %v431, 16
        %v435 = vrot.slane %v433, 5
        %v436 = vshrl.u32 %v431, 16
        %v438 = vrot.slane %v436, 4
        %v439 = vor.u32 %v438, %v435
        %v440 = vrot.slane %v439, 4
        %vm443 = vcmask 1043459
        %vm444 = vsmask.f32 7950
        %vm445 = vmand %vm443, %vm444
        %vm446 = vcmask 1047559
        %vm447 = vsmask.f32 7966
        %vm448 = vmand %vm446, %vm447
        %vm449 = vmor %vm448, %vm445
        %v450 = vld [vmem:[%s163 + $0x18] sm:$0x88]
        %v451 = vsel %vm449, %v435, %v450
        %452 = vst [vmem:[%s163 + $0x18] sm:$0x88] %v451
        %vm453 = vcmask 1043456
        %vm454 = vsmask.f32 3328
        %vm455 = vmand %vm453, %vm454
        %vm456 = vcmask 1047556
        %vm457 = vsmask.f32 7424
        %vm458 = vmand %vm456, %vm457
        %vm459 = vmor %vm458, %vm455
        %v460 = vld [vmem:[%s163 + $0x20] sm:$0xff]
        %v461 = vsel %vm459, %v440, %v460
        %462 = vst [vmem:[%s163 + $0x20] sm:$0xff] %v461
        %v463 = vunpack.c.h.b16 %v338
        %v464 = vunpack.c.h.b16 %v339
        %v465 = vpack.c.b16 %v464, %v463
        %v467 = vshrl.u32 %v465, 16
        %v469 = vrot.slane %v467, 7
        %v470 = vshll.u32 %v465, 16
        %v472 = vor.u32 %v469, %v470
        %v473 = vrot.slane %v469, 4
        %vm476 = vsmask.f32 7938
        %vm477 = vmand %vm453, %vm476
        %vm478 = vsmask.f32 7954
        %vm479 = vmand %vm456, %vm478
        %vm480 = vmor %vm479, %vm477
        %v481 = vld [vmem:[%s163 + $0x28] sm:$0xff]
        %v482 = vsel %vm480, %v472, %v481
        %483 = vst [vmem:[%s163 + $0x28] sm:$0xff] %v482
        %vm484 = vcmask 1040384
        %vm485 = vsmask.f32 256
        %vm486 = vmand %vm484, %vm485
        %vm487 = vcmask 1044484
        %vm488 = vsmask.f32 4352
        %vm489 = vmand %vm487, %vm488
        %vm490 = vmor %vm489, %vm486
        %v491 = vld [vmem:[%s163 + $0x30] sm:$0x11]
        %v492 = vsel %vm490, %v473, %v491
        %493 = vst [vmem:[%s163 + $0x30] sm:$0x11] %v492
        %v496 = vunpack.c.l.b16 %v340
        %v497 = vunpack.c.l.b16 %v341
        %v498 = vpack.c.b16 %v497, %v496
        %v500 = vshrl.u32 %v498, 16
        %v502 = vrot.slane %v500, 6
        %v503 = vshll.u32 %v498, 16
        %v505 = vrot.slane %v503, 7
        %v506 = vor.u32 %v502, %v505
        %v507 = vrot.slane %v506, 4
        %v510 = vld [vmem:[%s163 + $0x30] sm:$0xee]
        %v511 = vsel %vm379, %v506, %v510
        %512 = vst [vmem:[%s163 + $0x30] sm:$0xee] %v511
        %v513 = vld [vmem:[%s163 + $0x38] sm:$0x33]
        %v514 = vsel %vm389, %v507, %v513
        %515 = vst [vmem:[%s163 + $0x38] sm:$0x33] %v514
        %v516 = vunpack.c.h.b16 %v340
        %v517 = vunpack.c.h.b16 %v341
        %v518 = vpack.c.b16 %v517, %v516
        %v520 = vshrl.u32 %v518, 16
        %v522 = vrot.slane %v520, 5
        %v523 = vshll.u32 %v518, 16
        %v525 = vrot.slane %v523, 6
        %v526 = vor.u32 %v522, %v525
        %v527 = vrot.slane %v526, 4
        %v530 = vld [vmem:[%s163 + $0x38] sm:$0xcc]
        %v531 = vsel %vm413, %v526, %v530
        %532 = vst [vmem:[%s163 + $0x38] sm:$0xcc] %v531
        %v533 = vld [vmem:[%s163 + $0x40] sm:$0x77]
        %v534 = vsel %vm423, %v527, %v533
        %535 = vst [vmem:[%s163 + $0x40] sm:$0x77] %v534
        %v538 = vunpack.c.l.b16 %v342
        %v539 = vunpack.c.l.b16 %v343
        %v540 = vpack.c.b16 %v539, %v538
        %v542 = vshll.u32 %v540, 16
        %v544 = vrot.slane %v542, 5
        %v545 = vshrl.u32 %v540, 16
        %v547 = vrot.slane %v545, 4
        %v548 = vor.u32 %v547, %v544
        %v549 = vrot.slane %v548, 4
        %v552 = vld [vmem:[%s163 + $0x40] sm:$0x88]
        %v553 = vsel %vm449, %v544, %v552
        %554 = vst [vmem:[%s163 + $0x40] sm:$0x88] %v553
        %v555 = vld [vmem:[%s163 + $0x48] sm:$0xff]
        %v556 = vsel %vm459, %v549, %v555
        %557 = vst [vmem:[%s163 + $0x48] sm:$0xff] %v556
        %v558 = vunpack.c.h.b16 %v342
        %v559 = vunpack.c.h.b16 %v343
        %v560 = vpack.c.b16 %v559, %v558
        %v562 = vshrl.u32 %v560, 16
        %v564 = vrot.slane %v562, 7
        %v565 = vshll.u32 %v560, 16
        %v567 = vor.u32 %v564, %v565
        %v568 = vrot.slane %v564, 4
        %v571 = vld [vmem:[%s163 + $0x50] sm:$0xff]
        %v572 = vsel %vm480, %v567, %v571
        %573 = vst [vmem:[%s163 + $0x50] sm:$0xff] %v572
        %v574 = vld [vmem:[%s163 + $0x58] sm:$0x11]
        %v575 = vsel %vm490, %v568, %v574
        %576 = vst [vmem:[%s163 + $0x58] sm:$0x11] %v575
        %s577 = sand.u32 %s93, 1
        %s578 = scalar_lea.sflag [#allocation3], %s577
        %s579 = sand.u32 %s93, 1
        %s580 = smul.addr %s579, 104
        %s581 = scalar_lea.vmem [#allocation2], %s580
        // Predicated region
        $region33: #{tpu_custom_call.1} parent=31 // pred_check
          %p582 = pneg %p103
        $region34: #{tpu_custom_call.1} parent=31 // pred_check_branch
          %584 = sbr.rel (%p582) target = $region36
        $region35: #{tpu_custom_call.1} parent=31 // pred_region
          %s586 = ssub.s32 1664, 1664
          %587 = vsyncadd %s578, %s586
          %s588 = smul.addr %s17, 26
          %s589 = smul.addr %s588, 64
          %s590 = scalar_lea.hbm %s3, %s589
          %s591 = sshll.u32 %s581, 4
          %s592 = int_to_ptr.vmem [resolvable:$true] %s591
          %597 = dma.vmem_to_hbm [thread:$0]  %s592, 1664, %s590, %s578, 128, 128, 8
        $region36: #{tpu_custom_call.1} parent=31 // pred_fallthru
          _
      $region32: #{tpu_custom_call.1} parent=5 // pred_fallthru
        _
      %p598 = scmp.le.s32.totalorder 2, %s12
      // Predicated region
      $region37: #{tpu_custom_call.1} parent=5 // pred_check
        %p599 = pneg %p598
      $region38: #{tpu_custom_call.1} parent=5 // pred_check_branch
        %601 = sbr.rel (%p599) target = $region40
      $region39: #{tpu_custom_call.1} parent=5 // pred_region
        %s602 = ssub.s32 %s12, 2
        // Predicated region
        $region41: #{tpu_custom_call.1} parent=39 // pred_check
          %p603 = pneg %p109
        $region42: #{tpu_custom_call.1} parent=39 // pred_check_branch
          %605 = sbr.rel (%p603) target = $region44
        $region43: #{tpu_custom_call.1} parent=39 // pred_region
          %s606 = sand.u32 %s94, 1
          %s607 = scalar_lea.sflag [#allocation3], %s606
          %s608 = sand.u32 %s94, 1
          %s609 = smul.addr %s608, 104
          %s610 = scalar_lea.vmem [#allocation2], %s609
          %611 = dma.done %s607, 1664
        $region44: #{tpu_custom_call.1} parent=39 // pred_fallthru
          _
      $region40: #{tpu_custom_call.1} parent=5 // pred_fallthru
        _
    $region6: #{tpu_custom_call.1} parent=1 // loop_footer
      %s16 = sadd.s32 1, %s12
    $region7: #{tpu_custom_call.1} parent=1 // loop_footer_branch
      %11 = sbr.rel target = $region3
    $region8: #{tpu_custom_call.1} parent=1 // loop_exit
      _
    %612 = vsyncpa [#allocation3], 1
    %s613 = scalar_lea.sflag [#allocation3], 1
    %614 = vsyncpa %s613, 1

</llo_original>
